<compile_context>
chip_gen: v7x
topology: tpu7x:2x2x1
jax: 0.10.0
libtpu: 0.0.40
codegen_flags: <defaults>
</compile_context>

<pallas_src>
import functools

import jax
import jax.numpy as jnp
from jax import lax
from jax.experimental import pallas as pl
from jax.experimental.pallas import tpu as pltpu

_MIB = 1024 * 1024
ONEHOT_MAX_ROWS = 4096     # combined padded vocab rows above which we fall back
N_INFLIGHT = 32            # outstanding row-DMA pairs (fallback path)


def _round_up(x, m):
    return ((x + m - 1) // m) * m


def _chip_vmem_bytes():
    try:
        return int(pltpu.get_tpu_info().vmem_capacity_bytes)
    except Exception:
        return 64 * _MIB                       # conservative: v7x-class


def _vmem_limit_bytes():
    # v7x has 64 MiB physical VMEM -> cap at 48 MiB; v5e/v6e (128 MiB) -> 100.
    return 48 * _MIB if _chip_vmem_bytes() <= 64 * _MIB else 100 * _MIB


def _pick_row_tile(T):
    """Tokens per grid step: <=256, multiple of 8, >=2 grid steps when T>8."""
    if T <= 8:
        return 8
    return max(8, min(256, _round_up((T + 1) // 2, 8)))


# ---------------------------------------------------------------------------
# Fast path: VMEM-resident combined table, one-hot MXU gather per token tile.
# ---------------------------------------------------------------------------
def _onehot_embed_kernel(ids_ref, table_ref, out_ref, *, pos_row_offset):
    ids = ids_ref[...]                                   # (row_tile, 2) int32
    wid = ids[:, 0:1]                                    # (row_tile, 1)
    pid = ids[:, 1:2] + pos_row_offset                   # offset into pos rows
    rt = out_ref.shape[0]
    v_comb = table_ref.shape[0]
    col = lax.broadcasted_iota(jnp.int32, (rt, v_comb), 1)
    onehot = ((col == wid) | (col == pid)).astype(jnp.float32)
    # Single MXU matmul produces the concatenated [word | pos] embedding,
    # written with one lane-dense full-block store.
    out_ref[...] = jnp.dot(onehot, table_ref[...],
                           preferred_element_type=jnp.float32)


def _embed_onehot(ids_flat, combined_table, pos_row_offset, d_out):
    T = ids_flat.shape[0]
    v_comb, d_pad = combined_table.shape
    row_tile = _pick_row_tile(T)
    t_pad = _round_up(T, row_tile)
    ids_pad = jnp.zeros((t_pad, 2), jnp.int32).at[:T].set(
        ids_flat.astype(jnp.int32))
    grid = t_pad // row_tile

    cost = pl.CostEstimate(
        flops=2 * t_pad * v_comb * d_pad, transcendentals=0,
        bytes_accessed=(t_pad * 2 * 4 + v_comb * d_pad * 4
                        + t_pad * d_pad * 4))

    out = pl.pallas_call(
        functools.partial(_onehot_embed_kernel, pos_row_offset=pos_row_offset),
        out_shape=jax.ShapeDtypeStruct((t_pad, d_pad), jnp.float32),
        grid=(grid,),
        in_specs=[
            pl.BlockSpec((row_tile, 2), lambda i: (i, 0)),
            # Constant block index -> table stays resident in VMEM across
            # grid steps (no re-fetch).
            pl.BlockSpec((v_comb, d_pad), lambda i: (0, 0)),
        ],
        out_specs=pl.BlockSpec((row_tile, d_pad), lambda i: (i, 0)),
        compiler_params=pltpu.CompilerParams(
            dimension_semantics=("parallel",),        # megacore token tiles
            vmem_limit_bytes=_vmem_limit_bytes()),
        cost_estimate=cost,
    )(ids_pad, combined_table)
    return out[:T, :d_out]


# ---------------------------------------------------------------------------
# Fallback path (large vocab): per-row HBM DMA gather, 32 in-flight copies,
# DMAs land directly in the full-width output blocks, padded rows skipped.
# ---------------------------------------------------------------------------
def _dma_gather_kernel(ids_ref, nvalid_ref, wemb_hbm, pemb_hbm,
                       out_w_ref, out_p_ref, sem):
    t_total = ids_ref.shape[0] // 2          # ids layout: [word ids | pos ids]
    row_tile = out_w_ref.shape[0]
    base = pl.program_id(0) * row_tile
    rows = jnp.minimum(jnp.maximum(nvalid_ref[0] - base, 0), row_tile)
    n_prime = jnp.minimum(rows, N_INFLIGHT)

    def issue(r, slot, wid, pid):
        pltpu.make_async_copy(wemb_hbm.at[pl.ds(wid, 1), :],
                              out_w_ref.at[pl.ds(r, 1), :],
                              sem.at[0, slot]).start()
        pltpu.make_async_copy(pemb_hbm.at[pl.ds(pid, 1), :],
                              out_p_ref.at[pl.ds(r, 1), :],
                              sem.at[1, slot]).start()

    def wait(slot):
        # Descriptors used only for the wait byte-count (same shapes as issued).
        pltpu.make_async_copy(wemb_hbm.at[pl.ds(0, 1), :],
                              out_w_ref.at[pl.ds(0, 1), :],
                              sem.at[0, slot]).wait()
        pltpu.make_async_copy(pemb_hbm.at[pl.ds(0, 1), :],
                              out_p_ref.at[pl.ds(0, 1), :],
                              sem.at[1, slot]).wait()

    def _prime(r, carry):
        issue(r, r, ids_ref[base + r], ids_ref[t_total + base + r])
        return carry
    lax.fori_loop(0, n_prime, _prime, 0)

    def _steady(r, carry):
        slot = r & (N_INFLIGHT - 1)
        # Read ids before the wait (scalar loads not stalled behind it).
        wid = ids_ref[base + r]
        pid = ids_ref[t_total + base + r]
        wait(slot)
        issue(r, slot, wid, pid)
        return carry
    lax.fori_loop(N_INFLIGHT, rows, _steady, 0)

    def _drain(s, carry):
        wait(s)
        return carry
    lax.fori_loop(0, n_prime, _drain, 0)


def _embed_dma_gather(ids_flat, word_emb, pos_emb):
    T = ids_flat.shape[0]
    dw = word_emb.shape[1]
    dp = pos_emb.shape[1]
    row_tile = _pick_row_tile(T)
    t_pad = _round_up(T, row_tile)
    ids = ids_flat.astype(jnp.int32)
    ids1d = jnp.zeros((2 * t_pad,), jnp.int32)
    ids1d = ids1d.at[:T].set(ids[:, 0]).at[t_pad:t_pad + T].set(ids[:, 1])
    nvalid = jnp.array([T], jnp.int32)
    grid = t_pad // row_tile

    cost = pl.CostEstimate(
        flops=0, transcendentals=0,
        bytes_accessed=(2 * t_pad * 4 + T * (dw + dp) * 4
                        + t_pad * (dw + dp) * 4))

    out_w, out_p = pl.pallas_call(
        _dma_gather_kernel,
        out_shape=(jax.ShapeDtypeStruct((t_pad, dw), word_emb.dtype),
                   jax.ShapeDtypeStruct((t_pad, dp), pos_emb.dtype)),
        grid_spec=pltpu.PrefetchScalarGridSpec(
            num_scalar_prefetch=2,                      # ids + valid count
            grid=(grid,),
            in_specs=[pl.BlockSpec(memory_space=pl.ANY),   # word table in HBM
                      pl.BlockSpec(memory_space=pl.ANY)],  # pos table in HBM
            out_specs=[pl.BlockSpec((row_tile, dw), lambda i, ids, nv: (i, 0)),
                       pl.BlockSpec((row_tile, dp), lambda i, ids, nv: (i, 0))],
            scratch_shapes=[pltpu.SemaphoreType.DMA((2, N_INFLIGHT))],
        ),
        compiler_params=pltpu.CompilerParams(
            dimension_semantics=("arbitrary",),
            vmem_limit_bytes=_vmem_limit_bytes()),
        cost_estimate=cost,
    )(ids1d, nvalid, word_emb, pos_emb)
    return jnp.concatenate([out_w[:T], out_p[:T]], axis=-1)


# ---------------------------------------------------------------------------
# Module
# ---------------------------------------------------------------------------
class RMRRM:
    """JAX/Pallas port of the constructible portion of the PyTorch RMRRM."""

    def __init__(self, vocab_size=None, pos_vocab_size=None, emb_dim=100,
                 pos_emb_dim=100, dropout=0.3, init_emb=None, seed=42):
        kw, kp = jax.random.split(jax.random.PRNGKey(seed))
        if init_emb is not None:
            self.word_emb = jnp.asarray(init_emb, jnp.float32)
        else:
            # nn.Embedding default init is N(0, 1); reproduced deterministically.
            self.word_emb = jax.random.normal(kw, (vocab_size, emb_dim),
                                              jnp.float32)
        self.pos_emb = jax.random.normal(kp, (pos_vocab_size, pos_emb_dim),
                                         jnp.float32)
        self.dropout_p = dropout              # inference-mode identity

        vocab, dw = self.word_emb.shape
        pos_vocab, dp = self.pos_emb.shape
        self.d_out = dw + dp
        self._d_pad = _round_up(self.d_out, 128)      # lane-dense output width
        self._vw_pad = _round_up(vocab, 128)
        vp_pad = _round_up(pos_vocab, 128)
        v_comb = self._vw_pad + vp_pad
        table_bytes = v_comb * self._d_pad * 4
        # Resident-table fast path only when 2x (double-buffered) table plus
        # headroom fits the per-generation VMEM budget.
        self._use_onehot = (v_comb <= ONEHOT_MAX_ROWS and
                            2 * table_bytes + 8 * _MIB <= _vmem_limit_bytes())
        if self._use_onehot:
            tbl = jnp.zeros((v_comb, self._d_pad), jnp.float32)
            tbl = tbl.at[:vocab, :dw].set(self.word_emb)
            tbl = tbl.at[self._vw_pad:self._vw_pad + pos_vocab,
                         dw:dw + dp].set(self.pos_emb)
            self.combined_table = tbl
        # TODO(synk): for vocabs where the table fits VMEM but v_comb >
        # ONEHOT_MAX_ROWS, a VMEM-resident dynamic-row-read gather would beat
        # the HBM row-DMA fallback; not implemented here.

    def _embed_flat(self, ids_flat):
        if self._use_onehot:
            return _embed_onehot(ids_flat, self.combined_table,
                                 self._vw_pad, self.d_out)
        return _embed_dma_gather(ids_flat, self.word_emb, self.pos_emb)

    def embed(self, x):
        B, L, _ = x.shape
        return self._embed_flat(x.reshape(B * L, 2)).reshape(B, L, self.d_out)

    def forward(self, q, d, qlen, dlen):
        # Fuse q and d embedding into a single pallas_call (one launch).
        B, Lq, _ = q.shape
        _, Ld, _ = d.shape
        ids = jnp.concatenate([q.reshape(B * Lq, 2), d.reshape(B * Ld, 2)],
                              axis=0)
        emb = self._embed_flat(ids)
        q_emb = emb[:B * Lq].reshape(B, Lq, self.d_out)
        d_emb = emb[B * Lq:].reshape(B, Ld, self.d_out)
        # TODO(synk): RMRRM.score() depends on self.interactive_aligner /
        # self_aligner / evidence_collector / answer_pointer / use_rnn, none
        # of which are constructed in the reference __init__ (its forward
        # would raise AttributeError), so the score stage cannot be
        # implemented faithfully; the embedding stage is returned instead.
        return q_emb, d_emb


if __name__ == "__main__":
    key = jax.random.PRNGKey(0)
    B, Lq, Ld = 2, 8, 16
    vocab, pos_vocab = 64, 32
    emb_dim, pos_emb_dim = 64, 64            # d_out = 128 -> lane-dense output

    kqw, kqp, kdw, kdp = jax.random.split(key, 4)
    q = jnp.stack([jax.random.randint(kqw, (B, Lq), 0, vocab),
                   jax.random.randint(kqp, (B, Lq), 0, pos_vocab)],
                  axis=-1).astype(jnp.int32)
    d = jnp.stack([jax.random.randint(kdw, (B, Ld), 0, vocab),
                   jax.random.randint(kdp, (B, Ld), 0, pos_vocab)],
                  axis=-1).astype(jnp.int32)
    qlen = jnp.full((B,), Lq, dtype=jnp.int32)
    dlen = jnp.full((B,), Ld, dtype=jnp.int32)

    model = RMRRM(vocab_size=vocab, pos_vocab_size=pos_vocab,
                  emb_dim=emb_dim, pos_emb_dim=pos_emb_dim)

    q_emb, d_emb = model.forward(q, d, qlen, dlen)
    jax.block_until_ready((q_emb, d_emb))

    # Correctness vs plain-JAX gather reference.
    ref_q = jnp.concatenate([model.word_emb[q[..., 0]],
                             model.pos_emb[q[..., 1]]], axis=-1)
    ref_d = jnp.concatenate([model.word_emb[d[..., 0]],
                             model.pos_emb[d[..., 1]]], axis=-1)
    assert q_emb.shape == (B, Lq, emb_dim + pos_emb_dim)
    assert d_emb.shape == (B, Ld, emb_dim + pos_emb_dim)
    assert jnp.allclose(q_emb, ref_q, atol=1e-5)
    assert jnp.allclose(d_emb, ref_d, atol=1e-5)

    # Also exercise the large-vocab HBM row-DMA fallback path once.
    dma_out = _embed_dma_gather(q.reshape(B * Lq, 2),
                                model.word_emb, model.pos_emb)
    jax.block_until_ready(dma_out)
    assert jnp.allclose(dma_out.reshape(B, Lq, -1), ref_q, atol=1e-5)

    print("KERNEL_OK")
</pallas_src>

<mosaic_0001>
module attributes {stable_mosaic.version = 11 : i64} {
  func.func @_onehot_embed_kernel(%arg0: i32, %arg1: memref<24x2xi32, #tpu.memory_space<vmem>>, %arg2: memref<256x128xf32, #tpu.memory_space<vmem>>, %arg3: memref<24x128xf32, #tpu.memory_space<vmem>>) attributes {dimension_semantics = [#tpu.dimension_semantics<parallel>], iteration_bounds = array<i64: 2>, scalar_prefetch = 0 : i64, scratch_operands = 0 : i64, tpu.core_type = #tpu.core_type<tc>, window_params = [{transform_indices = @transform_0, window_bounds = array<i64: 24, 2>}, {pipeline_mode = #tpu.pipeline_mode<synchronous>, transform_indices = @transform_1, window_bounds = array<i64: 256, 128>}, {transform_indices = @transform_2, window_bounds = array<i64: 24, 128>}]} {
    %c0 = arith.constant 0 : index
    %c0_0 = arith.constant 0 : index
    %0 = vector.load %arg1[%c0, %c0_0] : memref<24x2xi32, #tpu.memory_space<vmem>>, vector<24x2xi32>
    %1 = vector.extract_strided_slice %0 {offsets = [0, 0], sizes = [24, 1], strides = [1, 1]} : vector<24x2xi32> to vector<24x1xi32>
    %2 = vector.extract_strided_slice %0 {offsets = [0, 1], sizes = [24, 1], strides = [1, 1]} : vector<24x2xi32> to vector<24x1xi32>
    %c128_i32 = arith.constant 128 : i32
    %3 = vector.broadcast %c128_i32 : i32 to vector<24x1xi32>
    %4 = arith.addi %2, %3 : vector<24x1xi32>
    %5 = tpu.iota {dimensions = array<i32: 1>} : vector<24x256xi32>
    %6 = vector.broadcast %1 : vector<24x1xi32> to vector<24x256xi32>
    %7 = arith.cmpi eq, %5, %6 : vector<24x256xi32>
    %8 = vector.broadcast %4 : vector<24x1xi32> to vector<24x256xi32>
    %9 = arith.cmpi eq, %5, %8 : vector<24x256xi32>
    %10 = arith.ori %7, %9 : vector<24x256xi1>
    %11 = arith.extui %10 : vector<24x256xi1> to vector<24x256xi32>
    %12 = arith.sitofp %11 : vector<24x256xi32> to vector<24x256xf32>
    %c0_1 = arith.constant 0 : index
    %c0_2 = arith.constant 0 : index
    %13 = vector.load %arg2[%c0_1, %c0_2] : memref<256x128xf32, #tpu.memory_space<vmem>>, vector<256x128xf32>
    %cst = arith.constant dense<0.000000e+00> : vector<24x128xf32>
    %14 = tpu.matmul %12, %13, %cst {dimension_numbers = #tpu.dot_dimension_numbers<[1], [0], [0], [1], [0, 0, 1, 1], [], []>} : vector<24x256xf32>, vector<256x128xf32>, vector<24x128xf32> -> vector<24x128xf32>
    %c0_3 = arith.constant 0 : index
    %c0_4 = arith.constant 0 : index
    %15 = vector.load %arg3[%c0_3, %c0_4] : memref<24x128xf32, #tpu.memory_space<vmem>>, vector<24x128xf32>
    tpu.vector_store %arg3[%c0_3, %c0_4], %14 {strides = array<i32>} : memref<24x128xf32, #tpu.memory_space<vmem>>, vector<24x128xf32>,
    return
  }
  func.func @transform_0(%arg0: i32) -> (i32, i32) {
    %c0_i32 = arith.constant 0 : i32
    %c0_i32_0 = arith.constant 0 : i32
    return %arg0, %c0_i32 : i32, i32
  }
  func.func @transform_1(%arg0: i32) -> (i32, i32) {
    %c0_i32 = arith.constant 0 : i32
    %c0_i32_0 = arith.constant 0 : i32
    %c0_i32_1 = arith.constant 0 : i32
    return %c0_i32, %c0_i32_0 : i32, i32
  }
  func.func @transform_2(%arg0: i32) -> (i32, i32) {
    %c0_i32 = arith.constant 0 : i32
    %c0_i32_0 = arith.constant 0 : i32
    return %arg0, %c0_i32 : i32, i32
  }
}

</mosaic_0001>

<llo_original>
// kernel: tpu_custom_call.1
$region0: #{tpu_custom_call.1}
  #allocation0 [shape = 'u32[]', space=smem, size = 0x4, offset = 0x4, fixed_abs, tag = 'smem constant byte address 0x4 - core index']
  #allocation1 [shape = 'u32[144,128]{1,0:T(1,128)}', space=vmem, size = 0x12000, scoped, tag = 'internal scratch']
  %s0 = inlined_call_operand.vmem [shape: s32[48,2], index: 0, kind: input, shape index: {}]
  %s1 = inlined_call_operand.hbm [shape: f32[256,128], index: 1, kind: input, shape index: {}]
  %s2 = inlined_call_operand.hbm [shape: f32[48,128], index: 2, kind: output, shape index: {}]
  %s3 = sld [smem:[#allocation0]]
  $region45: #{tpu_custom_call.1} parent=0
    _
  %s5 = ssub.s32 1, %s3
  %s6 = scalar_select 0, %s5, %s3
  $region1: #{tpu_custom_call.1} parent=0
    #allocation2 [shape = 'u8[131072]{0}', space=vmem, size = 0x20000, scoped, tag = 'input window, operand 1, single buffered']
    #allocation3 [shape = 's32[2]{0}', space=sflag, size = 0x8, scoped, tag = 'scoped memory for tpu_custom_call.1']
    #allocation4 [shape = 's32[2]{0}', space=sflag, size = 0x8, scoped, tag = 'scoped memory for tpu_custom_call.1']
    #allocation5 [shape = 'u8[24576]{0}', space=vmem, size = 0x6000, scoped, tag = 'output window, operand 0']
    %7 = vsyncpa [#allocation3], 0
    %8 = vsyncpa [#allocation4], 0
    %s9 = scalar_lea.sflag [#allocation4], 1
    %10 = vsyncpa %s9, 0
    loop: start=0, step=1, limit=4
    $region2: #{tpu_custom_call.1} parent=1 // loop_pre_header
      _
    $region3: #{tpu_custom_call.1} parent=1 // loop_header
      %s12 = sphi 0, %s16
      %p13 = scmp.ge.s32.totalorder %s12, 4
      %s22 = sphi 0, %s24
      %s25 = sphi 0, %s22
      %s26 = sphi 0, %s25
      %s42 = sphi 0, %s26
      %s46 = sphi 0, %s46
      %s48 = sphi 0, %s46
      %s49 = sphi 0, %s48
      %s63 = sphi 0, %s49
      %s69 = sphi 0, %s71
      %s72 = sphi 0, %s69
      %s73 = sphi 0, %s72
      %s89 = sphi 0, %s73
    $region4: #{tpu_custom_call.1} parent=1 // loop_header_branch
      %15 = sbr.rel (%p13) target = $region8
    $region5: #{tpu_custom_call.1} parent=1 // loop_body
      %s17 = ssub.s32 %s12, 1
      %s18 = ssub.s32 %s12, 2
      %s19 = sadd.s32 %s12, 1
      %s20 = ssub.s32 %s12, %s19
      %p21 = scmp.eq.s32.totalorder %s20, 0
      %s23 = sadd.s32 %s22, 1
      %s24 = scalar_select %p21, %s22, %s23
      %p27 = pneg %p21
      %p28 = scmp.eq.s32.totalorder %s12, 1
      %p29 = por %p27, %p28
      %p30 = scmp.ne.s32.totalorder %s22, %s25
      %p31 = scmp.eq.s32.totalorder %s12, 0
      %p32 = por %p30, %p31
      %p33 = scmp.ne.s32.totalorder %s22, %s25
      %p34 = scmp.eq.s32.totalorder %s17, 1
      %p35 = por %p33, %p34
      %p36 = scmp.ne.s32.totalorder %s25, %s26
      %p37 = scmp.eq.s32.totalorder %s17, 0
      %p38 = por %p36, %p37
      %p39 = scmp.ne.s32.totalorder %s25, %s26
      %p40 = scmp.eq.s32.totalorder %s18, 1
      %p41 = por %p39, %p40
      %p43 = scmp.ne.s32.totalorder %s26, %s42
      %p44 = scmp.eq.s32.totalorder %s18, 0
      %p45 = por %p43, %p44
      %s47 = sadd.s32 %s46, 1
      %p50 = scmp.eq.s32.totalorder %s12, 1
      %p51 = scmp.ne.s32.totalorder %s46, %s48
      %p52 = scmp.eq.s32.totalorder %s12, 0
      %p53 = por %p51, %p52
      %p54 = scmp.ne.s32.totalorder %s46, %s48
      %p55 = scmp.eq.s32.totalorder %s17, 1
      %p56 = por %p54, %p55
      %p57 = scmp.ne.s32.totalorder %s48, %s49
      %p58 = scmp.eq.s32.totalorder %s17, 0
      %p59 = por %p57, %p58
      %p60 = scmp.ne.s32.totalorder %s48, %s49
      %p61 = scmp.eq.s32.totalorder %s18, 1
      %p62 = por %p60, %p61
      %p64 = scmp.ne.s32.totalorder %s49, %s63
      %p65 = scmp.eq.s32.totalorder %s18, 0
      %p66 = por %p64, %p65
      %s67 = ssub.s32 %s12, %s19
      %p68 = scmp.eq.s32.totalorder %s67, 0
      %s70 = sadd.s32 %s69, 1
      %s71 = scalar_select %p68, %s69, %s70
      %p74 = pneg %p68
      %p75 = scmp.eq.s32.totalorder %s12, 1
      %p76 = por %p74, %p75
      %p77 = scmp.ne.s32.totalorder %s69, %s72
      %p78 = scmp.eq.s32.totalorder %s12, 0
      %p79 = por %p77, %p78
      %p80 = scmp.ne.s32.totalorder %s69, %s72
      %p81 = scmp.eq.s32.totalorder %s17, 1
      %p82 = por %p80, %p81
      %p83 = scmp.ne.s32.totalorder %s72, %s73
      %p84 = scmp.eq.s32.totalorder %s17, 0
      %p85 = por %p83, %p84
      %p86 = scmp.ne.s32.totalorder %s72, %s73
      %p87 = scmp.eq.s32.totalorder %s18, 1
      %p88 = por %p86, %p87
      %p90 = scmp.ne.s32.totalorder %s73, %s89
      %p91 = scmp.eq.s32.totalorder %s18, 0
      %p92 = por %p90, %p91
      %p93 = scmp.le.s32.totalorder 1, %s12
      %p94 = scmp.lt.s32.totalorder %s12, 3
      %p95 = pnand %p93, %p94
      %p96 = pneg %p95
      // Predicated region
      $region9: #{tpu_custom_call.1} parent=5 // pred_check
        _
      $region10: #{tpu_custom_call.1} parent=5 // pred_check_branch
        %98 = sbr.rel (%p95) target = $region12
      $region11: #{tpu_custom_call.1} parent=5 // pred_region
        %s99 = ssub.s32 %s12, 1
        // Predicated region
        $region13: #{tpu_custom_call.1} parent=11 // pred_check
          %p100 = pneg %p59
        $region14: #{tpu_custom_call.1} parent=11 // pred_check_branch
          %102 = sbr.rel (%p100) target = $region16
        $region15: #{tpu_custom_call.1} parent=11 // pred_region
          %s104 = ssub.s32 4096, 4096
          %105 = vsyncadd [#allocation3], %s104
          %s106 = sshll.u32 [#allocation2], 4
          %s107 = int_to_ptr.vmem [resolvable:$true] %s106
          %112 = dma.hbm_to_vmem [thread:$0]  %s1, 4096, %s107, [#allocation3], 128, 128, 8
        $region16: #{tpu_custom_call.1} parent=11 // pred_fallthru
          _
      $region12: #{tpu_custom_call.1} parent=5 // pred_fallthru
        _
      %p113 = scmp.lt.s32.totalorder %s12, 2
      // Predicated region
      $region17: #{tpu_custom_call.1} parent=5 // pred_check
        %p114 = pneg %p113
      $region18: #{tpu_custom_call.1} parent=5 // pred_check_branch
        %116 = sbr.rel (%p114) target = $region20
      $region19: #{tpu_custom_call.1} parent=5 // pred_region
        // Predicated region
        $region21: #{tpu_custom_call.1} parent=19 // pred_check
          %p117 = pneg %p32
        $region22: #{tpu_custom_call.1} parent=19 // pred_check_branch
          %119 = sbr.rel (%p117) target = $region24
        $region23: #{tpu_custom_call.1} parent=19 // pred_region
          %s120 = smul.u32 3, %s12
          %p121 = scmp.lt.s32.totalorder %s120, 5
          %s122 = scalar_select %p121, %s120, 5
          %s123 = smul.addr %s122, 8
          %s124 = scalar_lea.vmem %s0, %s123
          %s125 = smul.u32 3, %s12
        $region24: #{tpu_custom_call.1} parent=19 // pred_fallthru
          _
      $region20: #{tpu_custom_call.1} parent=5 // pred_fallthru
        _
      %p126 = scmp.le.s32.totalorder 1, %s12
      %p127 = scmp.lt.s32.totalorder %s12, 3
      %p128 = pnand %p126, %p127
      %p129 = pneg %p128
      // Predicated region
      $region25: #{tpu_custom_call.1} parent=5 // pred_check
        _
      $region26: #{tpu_custom_call.1} parent=5 // pred_check_branch
        %131 = sbr.rel (%p128) target = $region28
      $region27: #{tpu_custom_call.1} parent=5 // pred_region
        %s132 = ssub.s32 %s12, 1
        // Predicated region
        $region29: #{tpu_custom_call.1} parent=27 // pred_check
          %p133 = pneg %p59
        $region30: #{tpu_custom_call.1} parent=27 // pred_check_branch
          %135 = sbr.rel (%p133) target = $region32
        $region31: #{tpu_custom_call.1} parent=27 // pred_region
          %136 = dma.done [#allocation3], 4096
        $region32: #{tpu_custom_call.1} parent=27 // pred_fallthru
          _
        %s137 = smul.u32 3, %s17
        %p138 = scmp.lt.s32.totalorder %s137, 5
        %s139 = scalar_select %p138, %s137, 5
        %s140 = smul.addr %s139, 8
        %s141 = scalar_lea.vmem %s0, %s140
        %p142 = pneg %p38
        %p143 = pneg %p35
        %p144 = pneg %p59
        %p145 = pneg %p56
        %p146 = pneg %p85
        %p147 = pneg %p82
        %s148 = sand.u32 %s72, 1
        %s149 = scalar_lea.sflag [#allocation4], %s148
        %s150 = sand.u32 %s72, 1
        %s151 = smul.addr %s150, 24
        %s152 = scalar_lea.vmem [#allocation5], %s151
        %s153 = smul.u32 3, %s17
        %p154 = scmp.lt.s32.totalorder %s153, 5
        %s155 = scalar_select %p154, %s153, 5
        %s156 = smul.addr %s155, 8
        %s157 = scalar_lea.vmem %s0, %s156
        %s158 = smul.u32 3, %s17
        %s159 = smul.u32 3, %s17
        %v160 = vld [vmem:[%s157] sm:$0xff]
        %v161 = vld [vmem:[%s157 + $0x8] sm:$0xff]
        %v162 = vld [vmem:[%s157 + $0x10] sm:$0xff]
        %v163 = vadd.s32 %v160, 128
        %v164 = vadd.s32 %v161, 128
        %v165 = vadd.s32 %v162, 128
        %v166 = vlaneseq
        %v167 = vand.u32 %v166, 127
        %v168 = vadd.s32 %v167, 128
        %169 = vset.pattern.permute.xlu0 0
        %170 = vperm.xlu0 %169, %v160
        %v171 = vpop.permute.xlu0 %170
        %172 = vset.pattern.permute.xlu0 0
        %173 = vperm.xlu0 %172, %v161
        %v174 = vpop.permute.xlu0 %173
        %175 = vset.pattern.permute.xlu0 0
        %176 = vperm.xlu0 %175, %v162
        %v177 = vpop.permute.xlu0 %176
        %vm178 = vcmp.eq.s32.totalorder %v167, %v171
        %vm179 = vcmp.eq.s32.totalorder %v168, %v171
        %vm180 = vcmp.eq.s32.totalorder %v167, %v174
        %vm181 = vcmp.eq.s32.totalorder %v168, %v174
        %vm182 = vcmp.eq.s32.totalorder %v167, %v177
        %vm183 = vcmp.eq.s32.totalorder %v168, %v177
        %184 = vset.pattern.permute.xlu0 1
        %185 = vperm.xlu0 %184, %v163
        %v186 = vpop.permute.xlu0 %185
        %187 = vset.pattern.permute.xlu0 1
        %188 = vperm.xlu0 %187, %v164
        %v189 = vpop.permute.xlu0 %188
        %190 = vset.pattern.permute.xlu0 1
        %191 = vperm.xlu0 %190, %v165
        %v192 = vpop.permute.xlu0 %191
        %vm193 = vcmp.eq.s32.totalorder %v167, %v186
        %vm194 = vcmp.eq.s32.totalorder %v168, %v186
        %vm195 = vcmp.eq.s32.totalorder %v167, %v189
        %vm196 = vcmp.eq.s32.totalorder %v168, %v189
        %vm197 = vcmp.eq.s32.totalorder %v167, %v192
        %vm198 = vcmp.eq.s32.totalorder %v168, %v192
        %vm199 = vmor %vm178, %vm193
        %vm200 = vmor %vm179, %vm194
        %vm201 = vmor %vm180, %vm195
        %vm202 = vmor %vm181, %vm196
        %vm203 = vmor %vm182, %vm197
        %vm204 = vmor %vm183, %vm198
        %v205 = vsel %vm199, 1, 0
        %v206 = vsel %vm200, 1, 0
        %v207 = vsel %vm201, 1, 0
        %v208 = vsel %vm202, 1, 0
        %v209 = vsel %vm203, 1, 0
        %v210 = vsel %vm204, 1, 0
        %v211 = vcvt.s32.f32 %v205
        %v212 = vcvt.s32.f32 %v206
        %v213 = vcvt.s32.f32 %v207
        %v214 = vcvt.s32.f32 %v208
        %v215 = vcvt.s32.f32 %v209
        %v216 = vcvt.s32.f32 %v210
        %v217 = vld [vmem:[#allocation2] sm:$0xff]
        %v218 = vld [vmem:[#allocation2 + $0x8] sm:$0xff]
        %v219 = vld [vmem:[#allocation2 + $0x10] sm:$0xff]
        %v220 = vld [vmem:[#allocation2 + $0x18] sm:$0xff]
        %v221 = vld [vmem:[#allocation2 + $0x20] sm:$0xff]
        %v222 = vld [vmem:[#allocation2 + $0x28] sm:$0xff]
        %v223 = vld [vmem:[#allocation2 + $0x30] sm:$0xff]
        %v224 = vld [vmem:[#allocation2 + $0x38] sm:$0xff]
        %v225 = vld [vmem:[#allocation2 + $0x40] sm:$0xff]
        %v226 = vld [vmem:[#allocation2 + $0x48] sm:$0xff]
        %v227 = vld [vmem:[#allocation2 + $0x50] sm:$0xff]
        %v228 = vld [vmem:[#allocation2 + $0x58] sm:$0xff]
        %v229 = vld [vmem:[#allocation2 + $0x60] sm:$0xff]
        %v230 = vld [vmem:[#allocation2 + $0x68] sm:$0xff]
        %v231 = vld [vmem:[#allocation2 + $0x70] sm:$0xff]
        %v232 = vld [vmem:[#allocation2 + $0x78] sm:$0xff]
        %v233 = vld [vmem:[#allocation2 + $0x80] sm:$0xff]
        %v234 = vld [vmem:[#allocation2 + $0x88] sm:$0xff]
        %v235 = vld [vmem:[#allocation2 + $0x90] sm:$0xff]
        %v236 = vld [vmem:[#allocation2 + $0x98] sm:$0xff]
        %v237 = vld [vmem:[#allocation2 + $0xa0] sm:$0xff]
        %v238 = vld [vmem:[#allocation2 + $0xa8] sm:$0xff]
        %v239 = vld [vmem:[#allocation2 + $0xb0] sm:$0xff]
        %v240 = vld [vmem:[#allocation2 + $0xb8] sm:$0xff]
        %v241 = vld [vmem:[#allocation2 + $0xc0] sm:$0xff]
        %v242 = vld [vmem:[#allocation2 + $0xc8] sm:$0xff]
        %v243 = vld [vmem:[#allocation2 + $0xd0] sm:$0xff]
        %v244 = vld [vmem:[#allocation2 + $0xd8] sm:$0xff]
        %v245 = vld [vmem:[#allocation2 + $0xe0] sm:$0xff]
        %v246 = vld [vmem:[#allocation2 + $0xe8] sm:$0xff]
        %v247 = vld [vmem:[#allocation2 + $0xf0] sm:$0xff]
        %v248 = vld [vmem:[#allocation2 + $0xf8] sm:$0xff]
        %249 = vmatprep.subr.mxu0 0.0
        %250 = vmatpush1.msra.mxu0 %v217
        %251 = vmatprep.subr.mxu0 0.0
        %252 = vmatpush1.msra.mxu0 %v218
        %253 = vmatprep.subr.mxu0 0.0
        %254 = vmatpush1.msra.mxu0 %v219
        %255 = vmatprep.subr.mxu0 0.0
        %256 = vmatpush1.msra.mxu0 %v220
        %257 = vmatprep.subr.mxu0 0.0
        %258 = vmatpush1.msra.mxu0 %v221
        %259 = vmatprep.subr.mxu0 0.0
        %260 = vmatpush1.msra.mxu0 %v222
        %261 = vmatprep.subr.mxu0 0.0
        %262 = vmatpush1.msra.mxu0 %v223
        %263 = vmatprep.subr.mxu0 0.0
        %264 = vmatpush1.msra.mxu0 %v224
        %265 = vmatprep.subr.mxu0 0.0
        %266 = vmatpush1.msra.mxu0 %v225
        %267 = vmatprep.subr.mxu0 0.0
        %268 = vmatpush1.msra.mxu0 %v226
        %269 = vmatprep.subr.mxu0 0.0
        %270 = vmatpush1.msra.mxu0 %v227
        %271 = vmatprep.subr.mxu0 0.0
        %272 = vmatpush1.msra.mxu0 %v228
        %273 = vmatprep.subr.mxu0 0.0
        %274 = vmatpush1.msra.mxu0 %v229
        %275 = vmatprep.subr.mxu0 0.0
        %276 = vmatpush1.msra.mxu0 %v230
        %277 = vmatprep.subr.mxu0 0.0
        %278 = vmatpush1.msra.mxu0 %v231
        %279 = vmatprep.subr.mxu0 0.0
        %280 = vmatpush1.msra.mxu0 %v232
        %281 = vmatprep.subr.mxu0 0.0
        %282 = vmatpush1.msra.mxu0 %v233
        %283 = vmatprep.subr.mxu0 0.0
        %284 = vmatpush1.msra.mxu0 %v234
        %285 = vmatprep.subr.mxu0 0.0
        %286 = vmatpush1.msra.mxu0 %v235
        %287 = vmatprep.subr.mxu0 0.0
        %288 = vmatpush1.msra.mxu0 %v236
        %289 = vmatprep.subr.mxu0 0.0
        %290 = vmatpush1.msra.mxu0 %v237
        %291 = vmatprep.subr.mxu0 0.0
        %292 = vmatpush1.msra.mxu0 %v238
        %293 = vmatprep.subr.mxu0 0.0
        %294 = vmatpush1.msra.mxu0 %v239
        %295 = vmatprep.subr.mxu0 0.0
        %296 = vmatpush1.msra.mxu0 %v240
        %297 = vmatprep.subr.mxu0 0.0
        %298 = vmatpush1.msra.mxu0 %v241
        %299 = vmatprep.subr.mxu0 0.0
        %300 = vmatpush1.msra.mxu0 %v242
        %301 = vmatprep.subr.mxu0 0.0
        %302 = vmatpush1.msra.mxu0 %v243
        %303 = vmatprep.subr.mxu0 0.0
        %304 = vmatpush1.msra.mxu0 %v244
        %305 = vmatprep.subr.mxu0 0.0
        %306 = vmatpush1.msra.mxu0 %v245
        %307 = vmatprep.subr.mxu0 0.0
        %308 = vmatpush1.msra.mxu0 %v246
        %309 = vmatprep.subr.mxu0 0.0
        %310 = vmatpush1.msra.mxu0 %v247
        %311 = vmatprep.subr.mxu0 0.0
        %312 = vmatpush1.msra.mxu0 %v248
        %313 = vmatprep.mubr.f32.mxu0 %v212
        %314 = vmatmul.mubr.f32.gmra.mrb[0].mxu0 %v211
        %v315 = vpop.f32.mrb[0].mxu0
        %v316 = vadd.f32 0.0, %v315
        %v317 = vpop.f32.mrb[0].mxu0
        %318 = vmatprep.mubr.f32.mxu0 %v214
        %319 = vmatmul.mubr.f32.gmra.mrb[0].mxu0 %v213
        %v320 = vpop.f32.mrb[0].mxu0
        %v321 = vadd.f32 0.0, %v320
        %v322 = vpop.f32.mrb[0].mxu0
        %323 = vmatprep.mubr.f32.mxu0 %v216
        %324 = vmatmul.mubr.f32.gmra.mrb[0].mxu0 %v215
        %v325 = vpop.f32.mrb[0].mxu0
        %v326 = vadd.f32 0.0, %v325
        %v327 = vpop.f32.mrb[0].mxu0
        %328 = vdwg.mxu0
        %329 = vst [vmem:[%s152] sm:$0xff] %v316
        %330 = vst [vmem:[%s152 + $0x8] sm:$0xff] %v321
        %331 = vst [vmem:[%s152 + $0x10] sm:$0xff] %v326
        %s332 = sand.u32 %s72, 1
        %s333 = scalar_lea.sflag [#allocation4], %s332
        %s334 = sand.u32 %s72, 1
        %s335 = smul.addr %s334, 24
        %s336 = scalar_lea.vmem [#allocation5], %s335
        // Predicated region
        $region33: #{tpu_custom_call.1} parent=27 // pred_check
          %p337 = pneg %p82
        $region34: #{tpu_custom_call.1} parent=27 // pred_check_branch
          %339 = sbr.rel (%p337) target = $region36
        $region35: #{tpu_custom_call.1} parent=27 // pred_region
          %s340 = smul.u32 3, %s17
          %s342 = ssub.s32 384, 384
          %343 = vsyncadd %s333, %s342
          %s344 = smul.addr %s340, 128
          %s345 = scalar_lea.hbm %s2, %s344
          %s346 = sshll.u32 %s336, 4
          %s347 = int_to_ptr.vmem [resolvable:$true] %s346
          %352 = dma.vmem_to_hbm [thread:$0]  %s347, 384, %s345, %s333, 128, 128, 8
        $region36: #{tpu_custom_call.1} parent=27 // pred_fallthru
          _
      $region28: #{tpu_custom_call.1} parent=5 // pred_fallthru
        _
      %p353 = scmp.le.s32.totalorder 2, %s12
      // Predicated region
      $region37: #{tpu_custom_call.1} parent=5 // pred_check
        %p354 = pneg %p353
      $region38: #{tpu_custom_call.1} parent=5 // pred_check_branch
        %356 = sbr.rel (%p354) target = $region40
      $region39: #{tpu_custom_call.1} parent=5 // pred_region
        %s357 = ssub.s32 %s12, 2
        // Predicated region
        $region41: #{tpu_custom_call.1} parent=39 // pred_check
          %p358 = pneg %p88
        $region42: #{tpu_custom_call.1} parent=39 // pred_check_branch
          %360 = sbr.rel (%p358) target = $region44
        $region43: #{tpu_custom_call.1} parent=39 // pred_region
          %s361 = sand.u32 %s73, 1
          %s362 = scalar_lea.sflag [#allocation4], %s361
          %s363 = sand.u32 %s73, 1
          %s364 = smul.addr %s363, 24
          %s365 = scalar_lea.vmem [#allocation5], %s364
          %366 = dma.done %s362, 384
        $region44: #{tpu_custom_call.1} parent=39 // pred_fallthru
          _
      $region40: #{tpu_custom_call.1} parent=5 // pred_fallthru
        _
    $region6: #{tpu_custom_call.1} parent=1 // loop_footer
      %s16 = sadd.s32 1, %s12
    $region7: #{tpu_custom_call.1} parent=1 // loop_footer_branch
      %11 = sbr.rel target = $region3
    $region8: #{tpu_custom_call.1} parent=1 // loop_exit
      _
    %367 = vsyncpa [#allocation3], 1
    %s368 = scalar_lea.sflag [#allocation3], 1
    %369 = vsyncpa %s368, 1
    %370 = vsyncpa [#allocation4], 1
    %s371 = scalar_lea.sflag [#allocation4], 1
    %372 = vsyncpa %s371, 1

</llo_original>
